<compile_context>
chip_gen: v7x
topology: tpu7x:2x2x1
jax: 0.10.0
libtpu: 0.0.40
codegen_flags: <defaults>
</compile_context>

<pallas_src>
import functools
import math

import jax
import jax.numpy as jnp
from jax import lax
from jax.experimental import pallas as pl
from jax.experimental.pallas import tpu as pltpu

_VMEM_BUDGET = 24 << 20   # target working-set per grid step (fits every chip)
_VMEM_LIMIT = 28 << 20    # explicit scoped-VMEM limit (>= default on v5e)


def _rbf_kernel(neg2s_ref, ssqr_ref, ssqc_ref, xr_ref, xc_ref, o_ref, *,
                tile, exps, ratios, resident):
    """One (tile, tile) output block of sum_k exp(-L2 / (bw * mult_k)).

    neg2s_ref : (1, 1) SMEM f32     holds  2 / (bw * m_max)   (= -2 * scale)
    ssqr_ref  : (tile, 1) VMEM f32  scale * ||x_i||^2 for the row block
    ssqc_ref  : (1, tile) VMEM f32  scale * ||x_j||^2 for the column block
    xr_ref    : (tile, D) VMEM      row block of (centered) X
    xc_ref    : (tile, D) or (n_pad, D) VMEM  column operand (resident = full X)
    """
    if resident:
        j = pl.program_id(1)
        start = pl.multiple_of(j * tile, tile)
        xc = xc_ref[pl.ds(start, tile), :]
    else:
        xc = xc_ref[...]

    # Gram on the MXU, contracting the feature axis directly (no transpose).
    gram = lax.dot_general(
        xr_ref[...], xc, dimension_numbers=(((1,), (1,)), ((), ())),
        preferred_element_type=jnp.float32)                       # (tile, tile)

    # u = -L2/(bw*m_max) = scale*||xi||^2 + scale*||xj||^2 - 2*scale*<xi,xj>.
    # scale < 0 and L2 >= 0  =>  u <= 0; clamp to kill fp negatives of L2.
    u = jnp.minimum(ssqr_ref[...] + ssqc_ref[...] + neg2s_ref[0, 0] * gram, 0.0)

    if exps is not None:
        # Multipliers form a power-of-two ladder: kernel term k is t**(2**e_k)
        # with t = exp(u). One EUP exp per element + interleaved VALU
        # squarings, only two live (tile, tile) temporaries.
        t = jnp.exp(u)
        acc = t            # exps[0] == 0 (ratio 1 is always present)
        s = t
        prev = 0
        for e in exps[1:]:
            for _ in range(e - prev):
                s = s * s
            acc = acc + s
            prev = e
    else:
        # General multipliers: one exp per kernel term, still divide-free.
        acc = None
        for r in ratios:
            term = jnp.exp(u * float(r))
            acc = term if acc is None else acc + term

    o_ref[...] = acc.astype(o_ref.dtype)


def _round_up(a, b):
    return ((a + b - 1) // b) * b


def _block_bytes(tile, n_pad, d, isz, resident):
    b = 2 * tile * d * isz                                          # row operand
    b += 2 * n_pad * d * isz if resident else 3 * tile * d * isz    # col operand
    b += 2 * tile * tile * 4                                        # output tile
    b += 4 * tile * 4                                               # scaled norms
    return b


def rbf_forward(x, *, n_kernels=5, mul_factor=2.0, bandwidth=None,
                out_dtype=jnp.float32):
    """JAX/Pallas equivalent of RBF.forward (both bandwidth branches)."""
    n, d = x.shape

    multipliers = [float(mul_factor) ** (k - n_kernels // 2) for k in range(n_kernels)]
    m_max = max(multipliers)
    ratios = tuple(m_max / m for m in multipliers)   # exp(-l2/(bw*m)) = t**ratio

    # Detect a power-of-two ratio ladder (true for the default mul_factor=2).
    sorted_r = sorted(ratios)
    exps = []
    is_pow2 = True
    for r in sorted_r:
        if r <= 0.0:
            is_pow2 = False
            break
        e = int(round(math.log2(r)))
        if e < 0 or abs(r - float(2 ** e)) > 1e-9 * max(r, 1.0):
            is_pow2 = False
            break
        exps.append(e)
    is_pow2 = is_pow2 and len(exps) == len(ratios) and exps[0] == 0
    exps = tuple(exps) if is_pow2 else None

    # Center X (pairwise distances are translation-invariant); avoids
    # catastrophic cancellation in the closed-form bandwidth and the
    # ||a||^2 + ||b||^2 - 2<a,b> assembly when the data mean is large.
    x32 = x.astype(jnp.float32)
    xctr = x32 - jnp.mean(x32, axis=0, keepdims=True)
    x_feed = xctr.astype(x.dtype)
    row_sq = jnp.sum(xctr * xctr, axis=1)                     # (n,) f32

    if bandwidth is None:
        # sum_{i,j} ||x_i-x_j||^2 = 2*N*sum_i||x_i||^2 - 2*||sum_i x_i||^2
        col_sum = jnp.sum(xctr, axis=0)
        total = 2.0 * n * jnp.sum(row_sq) - 2.0 * jnp.dot(col_sum, col_sum)
        # NOTE: n == 1 divides by zero, same as the PyTorch reference.
        bw = total / float(n * n - n)
    else:
        bw = jnp.asarray(bandwidth, dtype=jnp.float32)

    scale = (-1.0 / (bw * m_max)).astype(jnp.float32)         # negative scalar
    neg2s = jnp.reshape((-2.0 * scale), (1, 1)).astype(jnp.float32)
    ssq = (scale * row_sq).astype(jnp.float32)                # (n,), <= 0

    # --- tile / padding / residency selection (VMEM-budget guarded) ---------
    isz = jnp.dtype(x.dtype).itemsize
    n_pad128 = _round_up(max(n, 1), 128)
    tile = 128
    for t in (512, 256, 128):
        if t <= n_pad128 and _block_bytes(t, _round_up(n, t), d, isz, False) <= _VMEM_BUDGET:
            tile = t
            break
    # TODO(synk): add a K-blocked (feature-axis) accumulation path for very
    # large D where even a (128, D) operand block exceeds the VMEM budget.
    n_pad = _round_up(max(n, tile), tile)
    resident = _block_bytes(tile, n_pad, d, isz, True) <= _VMEM_BUDGET

    if n_pad != n:
        x_p = jnp.zeros((n_pad, d), x.dtype).at[:n, :].set(x_feed)
        ssq_p = jnp.zeros((n_pad,), jnp.float32).at[:n].set(ssq)
    else:
        x_p = x_feed
        ssq_p = ssq
    ssq_row = ssq_p.reshape(n_pad, 1)
    ssq_col = ssq_p.reshape(1, n_pad)

    grid = (n_pad // tile, n_pad // tile)

    if resident:
        # Whole (padded) X stays in VMEM: constant index_map -> DMA'd once.
        xc_spec = pl.BlockSpec((n_pad, d), lambda i, j: (0, 0))
    else:
        xc_spec = pl.BlockSpec((tile, d), lambda i, j: (j, 0),
                               pipeline_mode=pl.Buffered(3))

    kernel = functools.partial(_rbf_kernel, tile=tile, exps=exps,
                               ratios=ratios, resident=resident)

    n_terms = 1 if exps is not None else n_kernels
    cost = pl.CostEstimate(
        flops=int(2 * n_pad * n_pad * d + 13 * n_pad * n_pad),
        transcendentals=int(n_pad * n_pad * n_terms),
        bytes_accessed=int(4 * n_pad * n_pad
                           + n_pad * d * isz * (2 if resident else 1 + grid[0])),
    )

    # TODO(synk): exploit out[i,j] == out[j,i] (upper-triangular tile grid with
    # transposed stores) to halve EUP/VALU work on compute-bound chips.
    out = pl.pallas_call(
        kernel,
        out_shape=jax.ShapeDtypeStruct((n_pad, n_pad), out_dtype),
        grid=grid,
        in_specs=[
            pl.BlockSpec(memory_space=pltpu.MemorySpace.SMEM),     # -2*scale
            pl.BlockSpec((tile, 1), lambda i, j: (i, 0)),          # scale*||x_i||^2
            pl.BlockSpec((1, tile), lambda i, j: (0, j)),          # scale*||x_j||^2
            pl.BlockSpec((tile, d), lambda i, j: (i, 0)),          # row block of X
            xc_spec,                                               # column operand
        ],
        out_specs=pl.BlockSpec((tile, tile), lambda i, j: (i, j)),
        compiler_params=pltpu.CompilerParams(
            dimension_semantics=("parallel", "parallel"),
            vmem_limit_bytes=_VMEM_LIMIT),
        cost_estimate=cost,
    )(neg2s, ssq_row, ssq_col, x_p, x_p)

    return out[:n, :n]


if __name__ == "__main__":
    key = jax.random.PRNGKey(0)
    k1, k2 = jax.random.split(key)

    def reference(x, n_kernels=5, mul_factor=2.0, bandwidth=None):
        # Pure-JAX mirror of the PyTorch module.
        n = x.shape[0]
        diff = x[:, None, :] - x[None, :, :]
        l2 = jnp.sum(diff * diff, axis=-1)
        bw = (jnp.sum(l2) / (n * n - n)) if bandwidth is None else bandwidth
        mults = mul_factor ** (jnp.arange(n_kernels) - n_kernels // 2)
        return jnp.sum(jnp.exp(-l2[None, ...] / (bw * mults)[:, None, None]), axis=0)

    # Case 1: default config (data-driven bandwidth), N=64 samples, D=32 feats.
    x1 = jax.random.normal(k1, (64, 32), dtype=jnp.float32)
    out1 = rbf_forward(x1)
    jax.block_until_ready(out1)
    ref1 = reference(x1)
    assert out1.shape == (64, 64)
    assert jnp.allclose(out1, ref1, rtol=1e-4, atol=1e-4), "mismatch (case 1)"

    # Case 2: N not a multiple of 128 (exercises padding), shifted data mean,
    # explicit bandwidth branch.
    x2 = jax.random.normal(k2, (100, 24), dtype=jnp.float32) * 0.5 + 3.0
    out2 = rbf_forward(x2, bandwidth=1.5)
    jax.block_until_ready(out2)
    ref2 = reference(x2, bandwidth=1.5)
    assert out2.shape == (100, 100)
    assert jnp.allclose(out2, ref2, rtol=1e-4, atol=1e-4), "mismatch (case 2)"

    print("KERNEL_OK")
</pallas_src>

<mosaic_0001>
module attributes {stable_mosaic.version = 11 : i64} {
  func.func @_rbf_kernel(%arg0: i32, %arg1: i32, %arg2: memref<1x1xf32, #tpu.memory_space<smem>>, %arg3: memref<128x1xf32, #tpu.memory_space<vmem>>, %arg4: memref<1x128xf32, #tpu.memory_space<vmem>>, %arg5: memref<128x32xf32, #tpu.memory_space<vmem>>, %arg6: memref<128x32xf32, #tpu.memory_space<vmem>>, %arg7: memref<128x128xf32, #tpu.memory_space<vmem>>) attributes {dimension_semantics = [#tpu.dimension_semantics<parallel>, #tpu.dimension_semantics<parallel>], iteration_bounds = array<i64: 1, 1>, scalar_prefetch = 0 : i64, scratch_operands = 0 : i64, tpu.core_type = #tpu.core_type<tc>, window_params = [{transform_indices = @transform_0, window_bounds = array<i64: 1, 1>}, {transform_indices = @transform_1, window_bounds = array<i64: 128, 1>}, {transform_indices = @transform_2, window_bounds = array<i64: 1, 128>}, {transform_indices = @transform_3, window_bounds = array<i64: 128, 32>}, {pipeline_mode = #tpu.pipeline_mode<synchronous>, transform_indices = @transform_4, window_bounds = array<i64: 128, 32>}, {transform_indices = @transform_5, window_bounds = array<i64: 128, 128>}]} {
    %c128_i32 = arith.constant 128 : i32
    %0 = arith.muli %arg1, %c128_i32 : i32
    %1 = tpu.assume_multiple %0, 128 : i32
    %2 = arith.index_cast %1 : i32 to index
    %c0 = arith.constant 0 : index
    %3 = vector.load %arg6[%2, %c0] : memref<128x32xf32, #tpu.memory_space<vmem>>, vector<128x32xf32>
    %c0_0 = arith.constant 0 : index
    %c0_1 = arith.constant 0 : index
    %4 = vector.load %arg5[%c0_0, %c0_1] : memref<128x32xf32, #tpu.memory_space<vmem>>, vector<128x32xf32>
    %cst = arith.constant dense<0.000000e+00> : vector<128x128xf32>
    %5 = tpu.matmul %4, %3, %cst {dimension_numbers = #tpu.dot_dimension_numbers<[1], [1], [0], [0], [0, 0, 1, 0], [], []>} : vector<128x32xf32>, vector<128x32xf32>, vector<128x128xf32> -> vector<128x128xf32>
    %c0_2 = arith.constant 0 : index
    %c0_3 = arith.constant 0 : index
    %6 = vector.load %arg3[%c0_2, %c0_3] : memref<128x1xf32, #tpu.memory_space<vmem>>, vector<128x1xf32>
    %c0_4 = arith.constant 0 : index
    %c0_5 = arith.constant 0 : index
    %7 = vector.load %arg4[%c0_4, %c0_5] : memref<1x128xf32, #tpu.memory_space<vmem>>, vector<1x128xf32>
    %8 = vector.broadcast %6 : vector<128x1xf32> to vector<128x128xf32>
    %9 = vector.broadcast %7 : vector<1x128xf32> to vector<128x128xf32>
    %10 = arith.addf %8, %9 : vector<128x128xf32>
    %c0_6 = arith.constant 0 : index
    %c0_7 = arith.constant 0 : index
    %11 = memref.load %arg2[%c0_6, %c0_7] : memref<1x1xf32, #tpu.memory_space<smem>>
    %12 = vector.broadcast %11 : f32 to vector<128x128xf32>
    %13 = arith.mulf %12, %5 : vector<128x128xf32>
    %14 = arith.addf %10, %13 : vector<128x128xf32>
    %cst_8 = arith.constant 0.000000e+00 : f32
    %15 = vector.broadcast %cst_8 : f32 to vector<128x128xf32>
    %16 = arith.minimumf %14, %15 : vector<128x128xf32>
    %17 = math.exp %16 : vector<128x128xf32>
    %18 = arith.mulf %17, %17 : vector<128x128xf32>
    %19 = arith.addf %17, %18 : vector<128x128xf32>
    %20 = arith.mulf %18, %18 : vector<128x128xf32>
    %21 = arith.addf %19, %20 : vector<128x128xf32>
    %22 = arith.mulf %20, %20 : vector<128x128xf32>
    %23 = arith.addf %21, %22 : vector<128x128xf32>
    %24 = arith.mulf %22, %22 : vector<128x128xf32>
    %25 = arith.addf %23, %24 : vector<128x128xf32>
    %c0_9 = arith.constant 0 : index
    %c0_10 = arith.constant 0 : index
    %26 = vector.load %arg7[%c0_9, %c0_10] : memref<128x128xf32, #tpu.memory_space<vmem>>, vector<128x128xf32>
    tpu.vector_store %arg7[%c0_9, %c0_10], %25 {strides = array<i32>} : memref<128x128xf32, #tpu.memory_space<vmem>>, vector<128x128xf32>,
    return
  }
  func.func @transform_0(%arg0: i32, %arg1: i32) -> (i32, i32) {
    %c0_i32 = arith.constant 0 : i32
    %c0_i32_0 = arith.constant 0 : i32
    %c0_i32_1 = arith.constant 0 : i32
    return %c0_i32, %c0_i32_0 : i32, i32
  }
  func.func @transform_1(%arg0: i32, %arg1: i32) -> (i32, i32) {
    %c0_i32 = arith.constant 0 : i32
    %c0_i32_0 = arith.constant 0 : i32
    return %arg0, %c0_i32 : i32, i32
  }
  func.func @transform_2(%arg0: i32, %arg1: i32) -> (i32, i32) {
    %c0_i32 = arith.constant 0 : i32
    %c0_i32_0 = arith.constant 0 : i32
    return %c0_i32, %arg1 : i32, i32
  }
  func.func @transform_3(%arg0: i32, %arg1: i32) -> (i32, i32) {
    %c0_i32 = arith.constant 0 : i32
    %c0_i32_0 = arith.constant 0 : i32
    return %arg0, %c0_i32 : i32, i32
  }
  func.func @transform_4(%arg0: i32, %arg1: i32) -> (i32, i32) {
    %c0_i32 = arith.constant 0 : i32
    %c0_i32_0 = arith.constant 0 : i32
    %c0_i32_1 = arith.constant 0 : i32
    return %c0_i32, %c0_i32_0 : i32, i32
  }
  func.func @transform_5(%arg0: i32, %arg1: i32) -> (i32, i32) {
    %c0_i32 = arith.constant 0 : i32
    return %arg0, %arg1 : i32, i32
  }
}

</mosaic_0001>

<llo_original>
// kernel: tpu_custom_call.1
$region0: #{tpu_custom_call.1}
  #allocation0 [shape = 'u32[]', space=smem, size = 0x4, offset = 0x4, fixed_abs, tag = 'smem constant byte address 0x4 - core index']
  #allocation1 [shape = 'u32[144,128]{1,0:T(1,128)}', space=vmem, size = 0x12000, scoped, tag = 'internal scratch']
  #allocation2 [shape = 'f32[1,1]{1,0:T(1,128)S(6)}', space=smem, size = 0x200, scoped, tag = 'scoped memory for tpu_custom_call.1']
  %s0 = inlined_call_operand.<no memory space> [shape: f32[1,1], index: 0, kind: input, shape index: {}]
  %s1 = inlined_call_operand.vmem [shape: f32[128,1], index: 1, kind: input, shape index: {}]
  %s2 = inlined_call_operand.vmem [shape: f32[1,128], index: 2, kind: input, shape index: {}]
  %s3 = inlined_call_operand.vmem [shape: f32[128,32], index: 3, kind: input, shape index: {}]
  %s4 = inlined_call_operand.vmem [shape: f32[128,32], index: 4, kind: input, shape index: {}]
  %s5 = inlined_call_operand.hbm [shape: f32[128,128], index: 5, kind: output, shape index: {}]
  %s6 = sld [smem:[#allocation0]]
  $region30: #{tpu_custom_call.1} parent=0
    _
  %s8 = ssub.s32 1, %s6
  %s9 = scalar_select 0, %s8, %s6
  %10 = sst [smem:[#allocation2]] %s0
  $region1: #{tpu_custom_call.1} parent=0
    #allocation3 [shape = 'u8[65536]{0}', space=vmem, size = 0x10000, scoped, tag = 'output window, operand 0, single buffered']
    #allocation4 [shape = 's32[1]{0}', space=sflag, size = 0x4, scoped, tag = 'scoped memory for tpu_custom_call.1']
    %11 = vsyncpa [#allocation4], 0
    // Predicated region
    $region2: #{tpu_custom_call.1} parent=1 // pred_check
      _
    $region3: #{tpu_custom_call.1} parent=1 // pred_check_branch
      %13 = sbr.rel (0) target = $region5
    $region4: #{tpu_custom_call.1} parent=1 // pred_region
      _
    $region5: #{tpu_custom_call.1} parent=1 // pred_fallthru
      _
    // Predicated region
    $region6: #{tpu_custom_call.1} parent=1 // pred_check
      _
    $region7: #{tpu_custom_call.1} parent=1 // pred_check_branch
      %15 = sbr.rel (0) target = $region9
    $region8: #{tpu_custom_call.1} parent=1 // pred_region
      _
    $region9: #{tpu_custom_call.1} parent=1 // pred_fallthru
      _
    // Predicated region
    $region10: #{tpu_custom_call.1} parent=1 // pred_check
      _
    $region11: #{tpu_custom_call.1} parent=1 // pred_check_branch
      %17 = sbr.rel (0) target = $region13
    $region12: #{tpu_custom_call.1} parent=1 // pred_region
      _
    $region13: #{tpu_custom_call.1} parent=1 // pred_fallthru
      _
    // Predicated region
    $region14: #{tpu_custom_call.1} parent=1 // pred_check
      _
    $region15: #{tpu_custom_call.1} parent=1 // pred_check_branch
      %19 = sbr.rel (0) target = $region17
    $region16: #{tpu_custom_call.1} parent=1 // pred_region
      _
    $region17: #{tpu_custom_call.1} parent=1 // pred_fallthru
      _
    // Predicated region
    $region18: #{tpu_custom_call.1} parent=1 // pred_check
      _
    $region19: #{tpu_custom_call.1} parent=1 // pred_check_branch
      %21 = sbr.rel (0) target = $region21
    $region20: #{tpu_custom_call.1} parent=1 // pred_region
      _
    $region21: #{tpu_custom_call.1} parent=1 // pred_fallthru
      _
    %s22 = smul.u32 0, 128
    %s23 = scalar_lea.vmem %s4, %s22
    %v24 = vld [vmem:[%s23] sm:$0xff]
    %v25 = vld [vmem:[%s23 + $0x8] sm:$0xff]
    %v26 = vld [vmem:[%s23 + $0x10] sm:$0xff]
    %v27 = vld [vmem:[%s23 + $0x18] sm:$0xff]
    %v28 = vld [vmem:[%s23 + $0x20] sm:$0xff]
    %v29 = vld [vmem:[%s23 + $0x28] sm:$0xff]
    %v30 = vld [vmem:[%s23 + $0x30] sm:$0xff]
    %v31 = vld [vmem:[%s23 + $0x38] sm:$0xff]
    %v32 = vld [vmem:[%s23 + $0x40] sm:$0xff]
    %v33 = vld [vmem:[%s23 + $0x48] sm:$0xff]
    %v34 = vld [vmem:[%s23 + $0x50] sm:$0xff]
    %v35 = vld [vmem:[%s23 + $0x58] sm:$0xff]
    %v36 = vld [vmem:[%s23 + $0x60] sm:$0xff]
    %v37 = vld [vmem:[%s23 + $0x68] sm:$0xff]
    %v38 = vld [vmem:[%s23 + $0x70] sm:$0xff]
    %v39 = vld [vmem:[%s23 + $0x78] sm:$0xff]
    %v40 = vld [vmem:[%s3] sm:$0xff]
    %v41 = vld [vmem:[%s3 + $0x8] sm:$0xff]
    %v42 = vld [vmem:[%s3 + $0x10] sm:$0xff]
    %v43 = vld [vmem:[%s3 + $0x18] sm:$0xff]
    %v44 = vld [vmem:[%s3 + $0x20] sm:$0xff]
    %v45 = vld [vmem:[%s3 + $0x28] sm:$0xff]
    %v46 = vld [vmem:[%s3 + $0x30] sm:$0xff]
    %v47 = vld [vmem:[%s3 + $0x38] sm:$0xff]
    %v48 = vld [vmem:[%s3 + $0x40] sm:$0xff]
    %v49 = vld [vmem:[%s3 + $0x48] sm:$0xff]
    %v50 = vld [vmem:[%s3 + $0x50] sm:$0xff]
    %v51 = vld [vmem:[%s3 + $0x58] sm:$0xff]
    %v52 = vld [vmem:[%s3 + $0x60] sm:$0xff]
    %v53 = vld [vmem:[%s3 + $0x68] sm:$0xff]
    %v54 = vld [vmem:[%s3 + $0x70] sm:$0xff]
    %v55 = vld [vmem:[%s3 + $0x78] sm:$0xff]
    %vm56 = vcmask 261120
    %v58 = vsel %vm56, %v40, 0
    %v61 = vsel %vm56, %v41, 0
    %v64 = vsel %vm56, %v42, 0
    %v67 = vsel %vm56, %v43, 0
    %v70 = vsel %vm56, %v44, 0
    %v73 = vsel %vm56, %v45, 0
    %v76 = vsel %vm56, %v46, 0
    %v79 = vsel %vm56, %v47, 0
    %v82 = vsel %vm56, %v48, 0
    %v85 = vsel %vm56, %v49, 0
    %v88 = vsel %vm56, %v50, 0
    %v91 = vsel %vm56, %v51, 0
    %v94 = vsel %vm56, %v52, 0
    %v97 = vsel %vm56, %v53, 0
    %v100 = vsel %vm56, %v54, 0
    %v103 = vsel %vm56, %v55, 0
    %v106 = vsel %vm56, %v24, 0
    %v109 = vsel %vm56, %v25, 0
    %v112 = vsel %vm56, %v26, 0
    %v115 = vsel %vm56, %v27, 0
    %v118 = vsel %vm56, %v28, 0
    %v121 = vsel %vm56, %v29, 0
    %v124 = vsel %vm56, %v30, 0
    %v127 = vsel %vm56, %v31, 0
    %v130 = vsel %vm56, %v32, 0
    %v133 = vsel %vm56, %v33, 0
    %v136 = vsel %vm56, %v34, 0
    %v139 = vsel %vm56, %v35, 0
    %v142 = vsel %vm56, %v36, 0
    %v145 = vsel %vm56, %v37, 0
    %v148 = vsel %vm56, %v38, 0
    %v151 = vsel %vm56, %v39, 0
    %153 = vmatprep.subr.mxu0 0.0
    %154 = vmatpush1.xpose.msra.mxu0 %v106
    %155 = vmatprep.subr.mxu0 0.0
    %156 = vmatpush1.xpose.msra.mxu0 %v109
    %157 = vmatprep.subr.mxu0 0.0
    %158 = vmatpush1.xpose.msra.mxu0 %v112
    %159 = vmatprep.subr.mxu0 0.0
    %160 = vmatpush1.xpose.msra.mxu0 %v115
    %161 = vmatprep.subr.mxu0 0.0
    %162 = vmatpush1.xpose.msra.mxu0 %v118
    %163 = vmatprep.subr.mxu0 0.0
    %164 = vmatpush1.xpose.msra.mxu0 %v121
    %165 = vmatprep.subr.mxu0 0.0
    %166 = vmatpush1.xpose.msra.mxu0 %v124
    %167 = vmatprep.subr.mxu0 0.0
    %168 = vmatpush1.xpose.msra.mxu0 %v127
    %169 = vmatprep.subr.mxu0 0.0
    %170 = vmatpush1.xpose.msra.mxu0 %v130
    %171 = vmatprep.subr.mxu0 0.0
    %172 = vmatpush1.xpose.msra.mxu0 %v133
    %173 = vmatprep.subr.mxu0 0.0
    %174 = vmatpush1.xpose.msra.mxu0 %v136
    %175 = vmatprep.subr.mxu0 0.0
    %176 = vmatpush1.xpose.msra.mxu0 %v139
    %177 = vmatprep.subr.mxu0 0.0
    %178 = vmatpush1.xpose.msra.mxu0 %v142
    %179 = vmatprep.subr.mxu0 0.0
    %180 = vmatpush1.xpose.msra.mxu0 %v145
    %181 = vmatprep.subr.mxu0 0.0
    %182 = vmatpush1.xpose.msra.mxu0 %v148
    %183 = vmatprep.subr.mxu0 0.0
    %184 = vmatpush1.xpose.msra.mxu0 %v151
    %185 = vmatprep.subr.mxu0 0.0
    %186 = vmatpush1.xpose.msra.mxu0 0.0
    %187 = vmatprep.subr.mxu0 0.0
    %188 = vmatpush1.xpose.msra.mxu0 0.0
    %189 = vmatprep.subr.mxu0 0.0
    %190 = vmatpush1.xpose.msra.mxu0 0.0
    %191 = vmatprep.subr.mxu0 0.0
    %192 = vmatpush1.xpose.msra.mxu0 0.0
    %193 = vmatprep.subr.mxu0 0.0
    %194 = vmatpush1.xpose.msra.mxu0 0.0
    %195 = vmatprep.subr.mxu0 0.0
    %196 = vmatpush1.xpose.msra.mxu0 0.0
    %197 = vmatprep.subr.mxu0 0.0
    %198 = vmatpush1.xpose.msra.mxu0 0.0
    %199 = vmatprep.subr.mxu0 0.0
    %200 = vmatpush1.xpose.msra.mxu0 0.0
    %201 = vmatprep.subr.mxu0 0.0
    %202 = vmatpush1.xpose.msra.mxu0 0.0
    %203 = vmatprep.subr.mxu0 0.0
    %204 = vmatpush1.xpose.msra.mxu0 0.0
    %205 = vmatprep.subr.mxu0 0.0
    %206 = vmatpush1.xpose.msra.mxu0 0.0
    %207 = vmatprep.subr.mxu0 0.0
    %208 = vmatpush1.xpose.msra.mxu0 0.0
    %209 = vmatprep.subr.mxu0 0.0
    %210 = vmatpush1.xpose.msra.mxu0 0.0
    %211 = vmatprep.subr.mxu0 0.0
    %212 = vmatpush1.xpose.msra.mxu0 0.0
    %213 = vmatprep.subr.mxu0 0.0
    %214 = vmatpush1.xpose.msra.mxu0 0.0
    %215 = vmatprep.subr.mxu0 0.0
    %216 = vmatpush1.xpose.msra.mxu0 0.0
    %217 = vmatprep.mubr.f32.mxu0 0.0
    %218 = vmatmul.mubr.f32.gmra.mrb[0].mxu0 %v58
    %v219 = vpop.f32.mrb[0].mxu0
    %v220 = vadd.f32 0.0, %v219
    %v221 = vpop.f32.mrb[0].mxu0
    %222 = vmatprep.mubr.f32.mxu0 0.0
    %223 = vmatmul.mubr.f32.gmra.mrb[0].mxu0 %v61
    %v224 = vpop.f32.mrb[0].mxu0
    %v225 = vadd.f32 0.0, %v224
    %v226 = vpop.f32.mrb[0].mxu0
    %227 = vmatprep.mubr.f32.mxu0 0.0
    %228 = vmatmul.mubr.f32.gmra.mrb[0].mxu0 %v64
    %v229 = vpop.f32.mrb[0].mxu0
    %v230 = vadd.f32 0.0, %v229
    %v231 = vpop.f32.mrb[0].mxu0
    %232 = vmatprep.mubr.f32.mxu0 0.0
    %233 = vmatmul.mubr.f32.gmra.mrb[0].mxu0 %v67
    %v234 = vpop.f32.mrb[0].mxu0
    %v235 = vadd.f32 0.0, %v234
    %v236 = vpop.f32.mrb[0].mxu0
    %237 = vmatprep.mubr.f32.mxu0 0.0
    %238 = vmatmul.mubr.f32.gmra.mrb[0].mxu0 %v70
    %v239 = vpop.f32.mrb[0].mxu0
    %v240 = vadd.f32 0.0, %v239
    %v241 = vpop.f32.mrb[0].mxu0
    %242 = vmatprep.mubr.f32.mxu0 0.0
    %243 = vmatmul.mubr.f32.gmra.mrb[0].mxu0 %v73
    %v244 = vpop.f32.mrb[0].mxu0
    %v245 = vadd.f32 0.0, %v244
    %v246 = vpop.f32.mrb[0].mxu0
    %247 = vmatprep.mubr.f32.mxu0 0.0
    %248 = vmatmul.mubr.f32.gmra.mrb[0].mxu0 %v76
    %v249 = vpop.f32.mrb[0].mxu0
    %v250 = vadd.f32 0.0, %v249
    %v251 = vpop.f32.mrb[0].mxu0
    %252 = vmatprep.mubr.f32.mxu0 0.0
    %253 = vmatmul.mubr.f32.gmra.mrb[0].mxu0 %v79
    %v254 = vpop.f32.mrb[0].mxu0
    %v255 = vadd.f32 0.0, %v254
    %v256 = vpop.f32.mrb[0].mxu0
    %257 = vmatprep.mubr.f32.mxu0 0.0
    %258 = vmatmul.mubr.f32.gmra.mrb[0].mxu0 %v82
    %v259 = vpop.f32.mrb[0].mxu0
    %v260 = vadd.f32 0.0, %v259
    %v261 = vpop.f32.mrb[0].mxu0
    %262 = vmatprep.mubr.f32.mxu0 0.0
    %263 = vmatmul.mubr.f32.gmra.mrb[0].mxu0 %v85
    %v264 = vpop.f32.mrb[0].mxu0
    %v265 = vadd.f32 0.0, %v264
    %v266 = vpop.f32.mrb[0].mxu0
    %267 = vmatprep.mubr.f32.mxu0 0.0
    %268 = vmatmul.mubr.f32.gmra.mrb[0].mxu0 %v88
    %v269 = vpop.f32.mrb[0].mxu0
    %v270 = vadd.f32 0.0, %v269
    %v271 = vpop.f32.mrb[0].mxu0
    %272 = vmatprep.mubr.f32.mxu0 0.0
    %273 = vmatmul.mubr.f32.gmra.mrb[0].mxu0 %v91
    %v274 = vpop.f32.mrb[0].mxu0
    %v275 = vadd.f32 0.0, %v274
    %v276 = vpop.f32.mrb[0].mxu0
    %277 = vmatprep.mubr.f32.mxu0 0.0
    %278 = vmatmul.mubr.f32.gmra.mrb[0].mxu0 %v94
    %v279 = vpop.f32.mrb[0].mxu0
    %v280 = vadd.f32 0.0, %v279
    %v281 = vpop.f32.mrb[0].mxu0
    %282 = vmatprep.mubr.f32.mxu0 0.0
    %283 = vmatmul.mubr.f32.gmra.mrb[0].mxu0 %v97
    %v284 = vpop.f32.mrb[0].mxu0
    %v285 = vadd.f32 0.0, %v284
    %v286 = vpop.f32.mrb[0].mxu0
    %287 = vmatprep.mubr.f32.mxu0 0.0
    %288 = vmatmul.mubr.f32.gmra.mrb[0].mxu0 %v100
    %v289 = vpop.f32.mrb[0].mxu0
    %v290 = vadd.f32 0.0, %v289
    %v291 = vpop.f32.mrb[0].mxu0
    %292 = vmatprep.mubr.f32.mxu0 0.0
    %293 = vmatmul.mubr.f32.gmra.mrb[0].mxu0 %v103
    %v294 = vpop.f32.mrb[0].mxu0
    %v295 = vadd.f32 0.0, %v294
    %v296 = vpop.f32.mrb[0].mxu0
    %297 = vdwg.mxu0
    %v298 = vld [vmem:[%s1] sm:$0xff]
    %v299 = vld [vmem:[%s1 + $0x8] sm:$0xff]
    %v300 = vld [vmem:[%s1 + $0x10] sm:$0xff]
    %v301 = vld [vmem:[%s1 + $0x18] sm:$0xff]
    %v302 = vld [vmem:[%s1 + $0x20] sm:$0xff]
    %v303 = vld [vmem:[%s1 + $0x28] sm:$0xff]
    %v304 = vld [vmem:[%s1 + $0x30] sm:$0xff]
    %v305 = vld [vmem:[%s1 + $0x38] sm:$0xff]
    %v306 = vld [vmem:[%s1 + $0x40] sm:$0xff]
    %v307 = vld [vmem:[%s1 + $0x48] sm:$0xff]
    %v308 = vld [vmem:[%s1 + $0x50] sm:$0xff]
    %v309 = vld [vmem:[%s1 + $0x58] sm:$0xff]
    %v310 = vld [vmem:[%s1 + $0x60] sm:$0xff]
    %v311 = vld [vmem:[%s1 + $0x68] sm:$0xff]
    %v312 = vld [vmem:[%s1 + $0x70] sm:$0xff]
    %v313 = vld [vmem:[%s1 + $0x78] sm:$0xff]
    %v314 = vld [vmem:[%s2] sm:$0x1]
    %316 = vset.pattern.permute.xlu0 0
    %317 = vperm.xlu0 %316, %v298
    %v318 = vpop.permute.xlu0 %317
    %321 = vset.pattern.permute.xlu0 0
    %322 = vperm.xlu0 %321, %v299
    %v323 = vpop.permute.xlu0 %322
    %326 = vset.pattern.permute.xlu0 0
    %327 = vperm.xlu0 %326, %v300
    %v328 = vpop.permute.xlu0 %327
    %331 = vset.pattern.permute.xlu0 0
    %332 = vperm.xlu0 %331, %v301
    %v333 = vpop.permute.xlu0 %332
    %336 = vset.pattern.permute.xlu0 0
    %337 = vperm.xlu0 %336, %v302
    %v338 = vpop.permute.xlu0 %337
    %341 = vset.pattern.permute.xlu0 0
    %342 = vperm.xlu0 %341, %v303
    %v343 = vpop.permute.xlu0 %342
    %346 = vset.pattern.permute.xlu0 0
    %347 = vperm.xlu0 %346, %v304
    %v348 = vpop.permute.xlu0 %347
    %351 = vset.pattern.permute.xlu0 0
    %352 = vperm.xlu0 %351, %v305
    %v353 = vpop.permute.xlu0 %352
    %356 = vset.pattern.permute.xlu0 0
    %357 = vperm.xlu0 %356, %v306
    %v358 = vpop.permute.xlu0 %357
    %361 = vset.pattern.permute.xlu0 0
    %362 = vperm.xlu0 %361, %v307
    %v363 = vpop.permute.xlu0 %362
    %366 = vset.pattern.permute.xlu0 0
    %367 = vperm.xlu0 %366, %v308
    %v368 = vpop.permute.xlu0 %367
    %371 = vset.pattern.permute.xlu0 0
    %372 = vperm.xlu0 %371, %v309
    %v373 = vpop.permute.xlu0 %372
    %376 = vset.pattern.permute.xlu0 0
    %377 = vperm.xlu0 %376, %v310
    %v378 = vpop.permute.xlu0 %377
    %381 = vset.pattern.permute.xlu0 0
    %382 = vperm.xlu0 %381, %v311
    %v383 = vpop.permute.xlu0 %382
    %386 = vset.pattern.permute.xlu0 0
    %387 = vperm.xlu0 %386, %v312
    %v388 = vpop.permute.xlu0 %387
    %391 = vset.pattern.permute.xlu0 0
    %392 = vperm.xlu0 %391, %v313
    %v393 = vpop.permute.xlu0 %392
    %v396 = vlaneseq
    %v397 = vshrl.u32 %v396, 7
    %v398 = vsub.s32 0, %v397
    %v399 = vrot.slane %v314, %v398
    %v401 = vadd.f32 %v318, %v399
    %v402 = vadd.f32 %v323, %v399
    %v403 = vadd.f32 %v328, %v399
    %v404 = vadd.f32 %v333, %v399
    %v405 = vadd.f32 %v338, %v399
    %v406 = vadd.f32 %v343, %v399
    %v407 = vadd.f32 %v348, %v399
    %v408 = vadd.f32 %v353, %v399
    %v409 = vadd.f32 %v358, %v399
    %v410 = vadd.f32 %v363, %v399
    %v411 = vadd.f32 %v368, %v399
    %v412 = vadd.f32 %v373, %v399
    %v413 = vadd.f32 %v378, %v399
    %v414 = vadd.f32 %v383, %v399
    %v415 = vadd.f32 %v388, %v399
    %v416 = vadd.f32 %v393, %v399
    %s417 = sld [smem:[#allocation2]]
    %v418 = vstv %s417
    %v419 = vmul.f32 %v418, %v220
    %v420 = vmul.f32 %v418, %v225
    %v421 = vmul.f32 %v418, %v230
    %v422 = vmul.f32 %v418, %v235
    %v423 = vmul.f32 %v418, %v240
    %v424 = vmul.f32 %v418, %v245
    %v425 = vmul.f32 %v418, %v250
    %v426 = vmul.f32 %v418, %v255
    %v427 = vmul.f32 %v418, %v260
    %v428 = vmul.f32 %v418, %v265
    %v429 = vmul.f32 %v418, %v270
    %v430 = vmul.f32 %v418, %v275
    %v431 = vmul.f32 %v418, %v280
    %v432 = vmul.f32 %v418, %v285
    %v433 = vmul.f32 %v418, %v290
    %v434 = vmul.f32 %v418, %v295
    %v435 = vadd.f32 %v401, %v419
    %v436 = vadd.f32 %v402, %v420
    %v437 = vadd.f32 %v403, %v421
    %v438 = vadd.f32 %v404, %v422
    %v439 = vadd.f32 %v405, %v423
    %v440 = vadd.f32 %v406, %v424
    %v441 = vadd.f32 %v407, %v425
    %v442 = vadd.f32 %v408, %v426
    %v443 = vadd.f32 %v409, %v427
    %v444 = vadd.f32 %v410, %v428
    %v445 = vadd.f32 %v411, %v429
    %v446 = vadd.f32 %v412, %v430
    %v447 = vadd.f32 %v413, %v431
    %v448 = vadd.f32 %v414, %v432
    %v449 = vadd.f32 %v415, %v433
    %v450 = vadd.f32 %v416, %v434
    %v451 = vmin.f32 %v435, 0.0
    %v452 = vmin.f32 %v436, 0.0
    %v453 = vmin.f32 %v437, 0.0
    %v454 = vmin.f32 %v438, 0.0
    %v455 = vmin.f32 %v439, 0.0
    %v456 = vmin.f32 %v440, 0.0
    %v457 = vmin.f32 %v441, 0.0
    %v458 = vmin.f32 %v442, 0.0
    %v459 = vmin.f32 %v443, 0.0
    %v460 = vmin.f32 %v444, 0.0
    %v461 = vmin.f32 %v445, 0.0
    %v462 = vmin.f32 %v446, 0.0
    %v463 = vmin.f32 %v447, 0.0
    %v464 = vmin.f32 %v448, 0.0
    %v465 = vmin.f32 %v449, 0.0
    %v466 = vmin.f32 %v450, 0.0
    %v467 = vmul.f32 %v451, 1.442695
    %v468 = vpow.pop %v467
    %v469 = vmul.f32 %v452, 1.442695
    %v470 = vpow.pop %v469
    %v471 = vmul.f32 %v453, 1.442695
    %v472 = vpow.pop %v471
    %v473 = vmul.f32 %v454, 1.442695
    %v474 = vpow.pop %v473
    %v475 = vmul.f32 %v455, 1.442695
    %v476 = vpow.pop %v475
    %v477 = vmul.f32 %v456, 1.442695
    %v478 = vpow.pop %v477
    %v479 = vmul.f32 %v457, 1.442695
    %v480 = vpow.pop %v479
    %v481 = vmul.f32 %v458, 1.442695
    %v482 = vpow.pop %v481
    %v483 = vmul.f32 %v459, 1.442695
    %v484 = vpow.pop %v483
    %v485 = vmul.f32 %v460, 1.442695
    %v486 = vpow.pop %v485
    %v487 = vmul.f32 %v461, 1.442695
    %v488 = vpow.pop %v487
    %v489 = vmul.f32 %v462, 1.442695
    %v490 = vpow.pop %v489
    %v491 = vmul.f32 %v463, 1.442695
    %v492 = vpow.pop %v491
    %v493 = vmul.f32 %v464, 1.442695
    %v494 = vpow.pop %v493
    %v495 = vmul.f32 %v465, 1.442695
    %v496 = vpow.pop %v495
    %v497 = vmul.f32 %v466, 1.442695
    %v498 = vpow.pop %v497
    %v499 = vmul.f32 %v468, %v468
    %v500 = vmul.f32 %v470, %v470
    %v501 = vmul.f32 %v472, %v472
    %v502 = vmul.f32 %v474, %v474
    %v503 = vmul.f32 %v476, %v476
    %v504 = vmul.f32 %v478, %v478
    %v505 = vmul.f32 %v480, %v480
    %v506 = vmul.f32 %v482, %v482
    %v507 = vmul.f32 %v484, %v484
    %v508 = vmul.f32 %v486, %v486
    %v509 = vmul.f32 %v488, %v488
    %v510 = vmul.f32 %v490, %v490
    %v511 = vmul.f32 %v492, %v492
    %v512 = vmul.f32 %v494, %v494
    %v513 = vmul.f32 %v496, %v496
    %v514 = vmul.f32 %v498, %v498
    %v515 = vadd.f32 %v468, %v499
    %v516 = vadd.f32 %v470, %v500
    %v517 = vadd.f32 %v472, %v501
    %v518 = vadd.f32 %v474, %v502
    %v519 = vadd.f32 %v476, %v503
    %v520 = vadd.f32 %v478, %v504
    %v521 = vadd.f32 %v480, %v505
    %v522 = vadd.f32 %v482, %v506
    %v523 = vadd.f32 %v484, %v507
    %v524 = vadd.f32 %v486, %v508
    %v525 = vadd.f32 %v488, %v509
    %v526 = vadd.f32 %v490, %v510
    %v527 = vadd.f32 %v492, %v511
    %v528 = vadd.f32 %v494, %v512
    %v529 = vadd.f32 %v496, %v513
    %v530 = vadd.f32 %v498, %v514
    %v531 = vmul.f32 %v499, %v499
    %v532 = vmul.f32 %v500, %v500
    %v533 = vmul.f32 %v501, %v501
    %v534 = vmul.f32 %v502, %v502
    %v535 = vmul.f32 %v503, %v503
    %v536 = vmul.f32 %v504, %v504
    %v537 = vmul.f32 %v505, %v505
    %v538 = vmul.f32 %v506, %v506
    %v539 = vmul.f32 %v507, %v507
    %v540 = vmul.f32 %v508, %v508
    %v541 = vmul.f32 %v509, %v509
    %v542 = vmul.f32 %v510, %v510
    %v543 = vmul.f32 %v511, %v511
    %v544 = vmul.f32 %v512, %v512
    %v545 = vmul.f32 %v513, %v513
    %v546 = vmul.f32 %v514, %v514
    %v547 = vadd.f32 %v515, %v531
    %v548 = vadd.f32 %v516, %v532
    %v549 = vadd.f32 %v517, %v533
    %v550 = vadd.f32 %v518, %v534
    %v551 = vadd.f32 %v519, %v535
    %v552 = vadd.f32 %v520, %v536
    %v553 = vadd.f32 %v521, %v537
    %v554 = vadd.f32 %v522, %v538
    %v555 = vadd.f32 %v523, %v539
    %v556 = vadd.f32 %v524, %v540
    %v557 = vadd.f32 %v525, %v541
    %v558 = vadd.f32 %v526, %v542
    %v559 = vadd.f32 %v527, %v543
    %v560 = vadd.f32 %v528, %v544
    %v561 = vadd.f32 %v529, %v545
    %v562 = vadd.f32 %v530, %v546
    %v563 = vmul.f32 %v531, %v531
    %v564 = vmul.f32 %v532, %v532
    %v565 = vmul.f32 %v533, %v533
    %v566 = vmul.f32 %v534, %v534
    %v567 = vmul.f32 %v535, %v535
    %v568 = vmul.f32 %v536, %v536
    %v569 = vmul.f32 %v537, %v537
    %v570 = vmul.f32 %v538, %v538
    %v571 = vmul.f32 %v539, %v539
    %v572 = vmul.f32 %v540, %v540
    %v573 = vmul.f32 %v541, %v541
    %v574 = vmul.f32 %v542, %v542
    %v575 = vmul.f32 %v543, %v543
    %v576 = vmul.f32 %v544, %v544
    %v577 = vmul.f32 %v545, %v545
    %v578 = vmul.f32 %v546, %v546
    %v579 = vadd.f32 %v547, %v563
    %v580 = vadd.f32 %v548, %v564
    %v581 = vadd.f32 %v549, %v565
    %v582 = vadd.f32 %v550, %v566
    %v583 = vadd.f32 %v551, %v567
    %v584 = vadd.f32 %v552, %v568
    %v585 = vadd.f32 %v553, %v569
    %v586 = vadd.f32 %v554, %v570
    %v587 = vadd.f32 %v555, %v571
    %v588 = vadd.f32 %v556, %v572
    %v589 = vadd.f32 %v557, %v573
    %v590 = vadd.f32 %v558, %v574
    %v591 = vadd.f32 %v559, %v575
    %v592 = vadd.f32 %v560, %v576
    %v593 = vadd.f32 %v561, %v577
    %v594 = vadd.f32 %v562, %v578
    %v595 = vmul.f32 %v563, %v563
    %v596 = vmul.f32 %v564, %v564
    %v597 = vmul.f32 %v565, %v565
    %v598 = vmul.f32 %v566, %v566
    %v599 = vmul.f32 %v567, %v567
    %v600 = vmul.f32 %v568, %v568
    %v601 = vmul.f32 %v569, %v569
    %v602 = vmul.f32 %v570, %v570
    %v603 = vmul.f32 %v571, %v571
    %v604 = vmul.f32 %v572, %v572
    %v605 = vmul.f32 %v573, %v573
    %v606 = vmul.f32 %v574, %v574
    %v607 = vmul.f32 %v575, %v575
    %v608 = vmul.f32 %v576, %v576
    %v609 = vmul.f32 %v577, %v577
    %v610 = vmul.f32 %v578, %v578
    %v611 = vadd.f32 %v579, %v595
    %v612 = vadd.f32 %v580, %v596
    %v613 = vadd.f32 %v581, %v597
    %v614 = vadd.f32 %v582, %v598
    %v615 = vadd.f32 %v583, %v599
    %v616 = vadd.f32 %v584, %v600
    %v617 = vadd.f32 %v585, %v601
    %v618 = vadd.f32 %v586, %v602
    %v619 = vadd.f32 %v587, %v603
    %v620 = vadd.f32 %v588, %v604
    %v621 = vadd.f32 %v589, %v605
    %v622 = vadd.f32 %v590, %v606
    %v623 = vadd.f32 %v591, %v607
    %v624 = vadd.f32 %v592, %v608
    %v625 = vadd.f32 %v593, %v609
    %v626 = vadd.f32 %v594, %v610
    %627 = vst [vmem:[#allocation3] sm:$0xff] %v611
    %628 = vst [vmem:[#allocation3 + $0x8] sm:$0xff] %v612
    %629 = vst [vmem:[#allocation3 + $0x10] sm:$0xff] %v613
    %630 = vst [vmem:[#allocation3 + $0x18] sm:$0xff] %v614
    %631 = vst [vmem:[#allocation3 + $0x20] sm:$0xff] %v615
    %632 = vst [vmem:[#allocation3 + $0x28] sm:$0xff] %v616
    %633 = vst [vmem:[#allocation3 + $0x30] sm:$0xff] %v617
    %634 = vst [vmem:[#allocation3 + $0x38] sm:$0xff] %v618
    %635 = vst [vmem:[#allocation3 + $0x40] sm:$0xff] %v619
    %636 = vst [vmem:[#allocation3 + $0x48] sm:$0xff] %v620
    %637 = vst [vmem:[#allocation3 + $0x50] sm:$0xff] %v621
    %638 = vst [vmem:[#allocation3 + $0x58] sm:$0xff] %v622
    %639 = vst [vmem:[#allocation3 + $0x60] sm:$0xff] %v623
    %640 = vst [vmem:[#allocation3 + $0x68] sm:$0xff] %v624
    %641 = vst [vmem:[#allocation3 + $0x70] sm:$0xff] %v625
    %642 = vst [vmem:[#allocation3 + $0x78] sm:$0xff] %v626
    // Predicated region
    $region22: #{tpu_custom_call.1} parent=1 // pred_check
      _
    $region23: #{tpu_custom_call.1} parent=1 // pred_check_branch
      %644 = sbr.rel (0) target = $region25
    $region24: #{tpu_custom_call.1} parent=1 // pred_region
      %s646 = ssub.s32 2048, 2048
      %647 = vsyncadd [#allocation4], %s646
      %s648 = sshll.u32 [#allocation3], 4
      %s649 = int_to_ptr.vmem [resolvable:$true] %s648
      %654 = dma.vmem_to_hbm [thread:$0]  %s649, 2048, %s5, [#allocation4], 128, 128, 8
    $region25: #{tpu_custom_call.1} parent=1 // pred_fallthru
      _
    // Predicated region
    $region26: #{tpu_custom_call.1} parent=1 // pred_check
      _
    $region27: #{tpu_custom_call.1} parent=1 // pred_check_branch
      %656 = sbr.rel (0) target = $region29
    $region28: #{tpu_custom_call.1} parent=1 // pred_region
      %657 = dma.done [#allocation4], 2048
    $region29: #{tpu_custom_call.1} parent=1 // pred_fallthru
      _
    %658 = vsyncpa [#allocation4], 1

</llo_original>
